<compile_context>
chip_gen: v6e
topology: v6e:2x2x1
jax: 0.10.0
libtpu: 0.0.40
codegen_flags: <defaults>
</compile_context>

<pallas_src>
import functools

import jax
import jax.numpy as jnp
from jax.experimental import pallas as pl
from jax.experimental.pallas import tpu as pltpu

# Set to jnp.bfloat16 on v6e/v7x for ~2x MXU throughput and half the VMEM/HBM
# bytes per tile at scale (accumulation stays f32 via preferred_element_type).
# Kept f32 here so the tiny demo matches the f32 PyTorch reference numerics.
_MXU_DTYPE = jnp.float32


def _mm(a, b):
    return jnp.dot(a.astype(_MXU_DTYPE), b.astype(_MXU_DTYPE),
                   preferred_element_type=jnp.float32)


# --------------------------- fused ST-block + l_x ---------------------------
# In-kernel activation layout: rows = channels (D), columns = flattened
# (w, b, n) position index (lane axis).  Every stage is either a small row
# operator (channel mix, (D,D)@(D,WBN)) or a column operator
# ((D,WBN)@(WBN,WBN)): GCN aggregation M, conv-tap shifts S_k, l_x as T.
# Note: at these dims total activations are only D*W*B*N = 512 elements, so
# the widest achievable lane extent for this slab is W*B*N = 64; the single
# fused launch + zero intermediate HBM traffic dominates any vst.msk cost.

def _fused_block_kernel(xt_ref, m_ref, s_ref, wg_ref, bg_ref, wc_ref, bc_ref,
                        t_ref, blx_ref, o_ref, *, num_taps):
    # GCN conv: project channels (row op), aggregate over the graph (col op).
    p = _mm(wg_ref[...], xt_ref[...])                          # (D, WBN)
    h = jnp.maximum(_mm(p, m_ref[...]) + bg_ref[...], 0.0)      # relu(A X Wg + bg)
    # Temporal Conv1d ('same' padding): per-tap window shift (col op) +
    # channel mix (row op), accumulated in registers -- no im2col buffers.
    acc = jnp.zeros_like(h)
    for k in range(num_taps):                                  # static unroll
        acc = acc + _mm(wc_ref[k], _mm(h, s_ref[k]))
    st = jnp.maximum(acc + bc_ref[...], 0.0)
    # l_x: Linear over the (n, w) axis, independent per (b, d) row -> a
    # batch-block-diagonal column operator T plus a per-column bias.
    o_ref[...] = (_mm(st, t_ref[...]) + blx_ref[...]).astype(o_ref.dtype)


def fused_st_lx(xt, m_op, s_op, wg_t, bg_col, wc_k, bc_col, t_op, blx_row):
    d, wbn = wg_t.shape[0], xt.shape[1]
    kernel = functools.partial(_fused_block_kernel, num_taps=wc_k.shape[0])
    # Single grid step; all operands whole-array resident in VMEM (< 100 KiB
    # here).  For much larger W*B*N, switch to a column-tiled grid instead.
    return pl.pallas_call(
        kernel,
        out_shape=jax.ShapeDtypeStruct((d, wbn), jnp.float32),
    )(xt, m_op, s_op, wg_t, bg_col, wc_k, bc_col, t_op, blx_row)


# ----------------------------- tiled linear (l_y) ----------------------------

def _linear_tiled_kernel(x_ref, w_ref, b_ref, o_ref, acc_ref, *, relu):
    @pl.when(pl.program_id(2) == 0)
    def _init():
        acc_ref[...] = jnp.zeros_like(acc_ref)

    acc_ref[...] += _mm(x_ref[...], w_ref[...])

    @pl.when(pl.program_id(2) == pl.num_programs(2) - 1)
    def _finalize():
        r = acc_ref[...] + b_ref[...]
        if relu:
            r = jnp.maximum(r, 0.0)
        o_ref[...] = r.astype(o_ref.dtype)


def pallas_linear(x, w, b, *, relu=False, tm=256, tn=256, tk=512):
    """y = x @ w + b with w of shape (in, out).

    Real (tm, tn, tk) tiling with an f32 VMEM accumulator; any axis that is
    small or not tile-divisible falls back to a full block (small-shape fast
    path).  Tile defaults fit v7x's smaller 64 MiB VMEM with double buffering.
    """
    m, k_dim = x.shape
    k2, n = w.shape
    assert k_dim == k2
    b = b.reshape(1, n)

    def pick(dim, tile):
        return dim if (dim <= tile or dim % tile != 0) else tile

    tm, tn, tk = pick(m, tm), pick(n, tn), pick(k_dim, tk)
    grid = (m // tm, n // tn, k_dim // tk)
    return pl.pallas_call(
        functools.partial(_linear_tiled_kernel, relu=relu),
        out_shape=jax.ShapeDtypeStruct((m, n), jnp.float32),
        grid=grid,
        in_specs=[
            pl.BlockSpec((tm, tk), lambda i, j, k: (i, k)),
            # weight block constant along the M axis -> stays VMEM-resident
            pl.BlockSpec((tk, tn), lambda i, j, k: (k, j)),
            pl.BlockSpec((1, tn), lambda i, j, k: (0, j)),
        ],
        out_specs=pl.BlockSpec((tm, tn), lambda i, j, k: (i, j)),
        scratch_shapes=[pltpu.VMEM((tm, tn), jnp.float32)],
        compiler_params=pltpu.CompilerParams(
            dimension_semantics=("parallel", "parallel", "arbitrary")),
    )(x, w, b)


# ------------------------------- model forward -------------------------------

@functools.partial(
    jax.jit,
    static_argnames=("window_size", "num_series", "batch_size", "horizon",
                     "conv_kernel", "conv_dilation"))
def _forward_impl(params, x_stack, A, E, *, window_size, num_series,
                  batch_size, horizon, conv_kernel, conv_dilation):
    # TODO(synk): SimpleBlockMultiGraph's source is not provided; the ST block
    # is implemented per its documented structure (GCN conv -> temporal Conv1d
    # over the window with 'same' padding -> ReLU).  E, out_channels and
    # dropout (=0) are unused by this stand-in.
    W, B, N = window_size, batch_size, num_series
    BN, WBN = B * N, W * B * N
    C = x_stack.shape[-1]
    D = params["w_gcn"].shape[1]
    K, dil = conv_kernel, conv_dilation
    pad = dil * (K - 1) // 2        # 'same' padding; exact for odd conv_kernel

    # Lane-major activation slab: (C, W*B*N), columns ordered (w, b, n).
    xt = jnp.transpose(x_stack, (2, 0, 1)).reshape(C, WBN)

    # ----- small structural operators, built once per call in XLA glue -----
    # GCN aggregation: out[:, (w,b,n)] = sum_n' A[n,n'] * in[:, (w,b,n')]
    m_op = jnp.kron(jnp.eye(W * B, dtype=A.dtype), A.T)               # (WBN, WBN)
    # Temporal-conv tap-k shift: out[:, w] = in[:, w - pad + k*dil] (0 outside)
    s_op = jnp.stack(
        [jnp.kron(jnp.eye(W, k=pad - k * dil, dtype=A.dtype),
                  jnp.eye(BN, dtype=A.dtype)) for k in range(K)], axis=0)
    # l_x as a column operator: T[(w',b',n'),(w,b,n)] = d(b,b') * Wlx[(n,w),(n',w')]
    # (block-diagonal over b; for very large batch, grid over b instead of
    #  expanding -- fine at these sizes).
    g = params["w_lx"].reshape(N, W, N, W)          # [n, w, n', w']
    gp = jnp.transpose(g, (3, 2, 1, 0))             # [w', n', w, n]
    eye_b = jnp.eye(B, dtype=g.dtype)
    t_op = (gp[:, None, :, :, None, :] *
            eye_b[None, :, None, None, :, None]).reshape(WBN, WBN)
    blx_row = jnp.broadcast_to(
        jnp.transpose(params["b_lx"].reshape(N, W))[:, None, :], (W, B, N)
    ).reshape(1, WBN)

    # Weights in row-operator (out-channel major) form.
    wg_t = params["w_gcn"].T                         # (D, C)
    bg_col = params["b_gcn"].reshape(-1, 1)          # (D, 1)
    wc_k = jnp.transpose(params["conv_w"], (2, 0, 1))  # (K, D_out, D_in)
    bc_col = params["conv_b"].reshape(-1, 1)         # (D, 1)

    # ----- fused GCN + temporal conv + l_x: one Pallas call, one grid step -----
    xl = fused_st_lx(xt, m_op, s_op, wg_t, bg_col, wc_k, bc_col, t_op, blx_row)
    xl4 = xl.reshape(D, W, B, N)                     # xl4[d, w, b, n]

    # Block's x_list output: x_list[w][b*N+n, d] = xl4[d, w, b, n]
    x_out = jnp.transpose(xl4, (1, 2, 3, 0)).reshape(W, BN, D)

    # l_y input, flattened exactly as PyTorch: column order (n, d, w).
    yb = jnp.transpose(xl4, (2, 3, 0, 1)).reshape(B, N * D * W)   # (B, W*N*D)
    y = pallas_linear(yb, params["w_ly"].T, params["b_ly"])       # (B, N*H)
    return x_out, y.reshape(B, horizon, N)


_STATIC_KEYS = ("num_series", "horizon", "conv_kernel", "conv_dilation")


def nbeats_block_forward(params, x_list, A, E, batch_size):
    """Matches NBEATSBlock.forward(x_list, A, E, batch_size): returns
    (list of window_size arrays (B*N, inter_dim), y of shape (B, H, N))."""
    weights = {k: v for k, v in params.items() if k not in _STATIC_KEYS}
    x_stack = jnp.stack(x_list, axis=0)   # (W, B*N, C); no list plumbing past here
    x_out, y = _forward_impl(
        weights, x_stack, A, E,
        window_size=len(x_list), num_series=params["num_series"],
        batch_size=batch_size, horizon=params["horizon"],
        conv_kernel=params["conv_kernel"],
        conv_dilation=params["conv_dilation"])
    # Slice back into the module's list-of-(B*N, D) contract at the boundary.
    return [x_out[w] for w in range(x_out.shape[0])], y


# --------------------------------- parameters ---------------------------------

def init_params(key, window_size, num_series, horizon, in_channels, inter_dim,
                conv_kernel, conv_dilation):
    ks = jax.random.split(key, 8)

    def unif(k, shape, fan_in):
        bound = 1.0 / (fan_in ** 0.5)
        return jax.random.uniform(k, shape, jnp.float32, -bound, bound)

    NW = num_series * window_size
    ly_in = window_size * num_series * inter_dim
    ly_out = num_series * horizon
    return {
        "num_series": num_series, "horizon": horizon,
        "conv_kernel": conv_kernel, "conv_dilation": conv_dilation,
        # GCN stand-in: H = relu(A @ X @ w_gcn + b_gcn)
        "w_gcn": unif(ks[0], (in_channels, inter_dim), in_channels),
        "b_gcn": unif(ks[1], (inter_dim,), in_channels),
        # Conv1d weight in PyTorch layout (out, in, K)
        "conv_w": unif(ks[2], (inter_dim, inter_dim, conv_kernel),
                       inter_dim * conv_kernel),
        "conv_b": unif(ks[3], (inter_dim,), inter_dim * conv_kernel),
        # l_x / l_y Linear weights in PyTorch (out, in) layout
        "w_lx": unif(ks[4], (NW, NW), NW),
        "b_lx": unif(ks[5], (NW,), NW),
        "w_ly": unif(ks[6], (ly_out, ly_in), ly_in),
        "b_ly": unif(ks[7], (ly_out,), ly_in),
    }


# ------------------------------------ main ------------------------------------

if __name__ == "__main__":
    WINDOW, NUM_SERIES, HORIZON = 8, 4, 4
    IN_CH, INTER_DIM = 8, 8
    BATCH = 2

    key = jax.random.PRNGKey(0)
    kp, kx, ka = jax.random.split(key, 3)
    params = init_params(kp, WINDOW, NUM_SERIES, HORIZON, IN_CH, INTER_DIM,
                         conv_kernel=3, conv_dilation=1)

    xkeys = jax.random.split(kx, WINDOW)
    x_list = [jax.random.normal(xkeys[w], (BATCH * NUM_SERIES, IN_CH), jnp.float32)
              for w in range(WINDOW)]
    A_raw = jax.random.uniform(ka, (NUM_SERIES, NUM_SERIES), jnp.float32)
    A = A_raw / jnp.sum(A_raw, axis=1, keepdims=True)     # row-normalized adjacency
    E = jnp.zeros((NUM_SERIES, NUM_SERIES), jnp.float32)  # unused by stand-in

    x_out, y = nbeats_block_forward(params, x_list, A, E, BATCH)
    jax.block_until_ready(y)
    jax.block_until_ready(x_out[0])

    assert y.shape == (BATCH, HORIZON, NUM_SERIES)
    assert len(x_out) == WINDOW and x_out[0].shape == (NUM_SERIES * BATCH, INTER_DIM)
    print("KERNEL_OK")
</pallas_src>

<mosaic_0001>
module attributes {stable_mosaic.version = 11 : i64} {
  func.func @_linear_tiled_kernel(%arg0: i32, %arg1: i32, %arg2: i32, %arg3: memref<2x256xf32, #tpu.memory_space<vmem>>, %arg4: memref<256x16xf32, #tpu.memory_space<vmem>>, %arg5: memref<1x16xf32, #tpu.memory_space<vmem>>, %arg6: memref<2x16xf32, #tpu.memory_space<vmem>>, %arg7: memref<2x16xf32, #tpu.memory_space<vmem>>) attributes {dimension_semantics = [#tpu.dimension_semantics<parallel>, #tpu.dimension_semantics<parallel>, #tpu.dimension_semantics<arbitrary>], iteration_bounds = array<i64: 1, 1, 1>, scalar_prefetch = 0 : i64, scratch_operands = 1 : i64, tpu.core_type = #tpu.core_type<tc>, window_params = [{transform_indices = @transform_0, window_bounds = array<i64: 2, 256>}, {transform_indices = @transform_1, window_bounds = array<i64: 256, 16>}, {transform_indices = @transform_2, window_bounds = array<i64: 1, 16>}, {transform_indices = @transform_3, window_bounds = array<i64: 2, 16>}]} {
    %c0_i32 = arith.constant 0 : i32
    %0 = arith.cmpi eq, %arg2, %c0_i32 : i32
    %1 = arith.extui %0 : i1 to i32
    %c0_i32_0 = arith.constant 0 : i32
    %2 = arith.cmpi ne, %1, %c0_i32_0 : i32
    scf.if %2 {
      %cst_10 = arith.constant 0.000000e+00 : f32
      %12 = vector.broadcast %cst_10 : f32 to vector<2x16xf32>
      %c0_11 = arith.constant 0 : index
      %c0_12 = arith.constant 0 : index
      %13 = vector.load %arg7[%c0_11, %c0_12] : memref<2x16xf32, #tpu.memory_space<vmem>>, vector<2x16xf32>
      tpu.vector_store %arg7[%c0_11, %c0_12], %12 {strides = array<i32>} : memref<2x16xf32, #tpu.memory_space<vmem>>, vector<2x16xf32>,
    } else {
    }
    %c0 = arith.constant 0 : index
    %c0_1 = arith.constant 0 : index
    %3 = vector.load %arg7[%c0, %c0_1] : memref<2x16xf32, #tpu.memory_space<vmem>>, vector<2x16xf32>
    %c0_2 = arith.constant 0 : index
    %c0_3 = arith.constant 0 : index
    %4 = vector.load %arg3[%c0_2, %c0_3] : memref<2x256xf32, #tpu.memory_space<vmem>>, vector<2x256xf32>
    %c0_4 = arith.constant 0 : index
    %c0_5 = arith.constant 0 : index
    %5 = vector.load %arg4[%c0_4, %c0_5] : memref<256x16xf32, #tpu.memory_space<vmem>>, vector<256x16xf32>
    %cst = arith.constant dense<0.000000e+00> : vector<2x16xf32>
    %6 = tpu.matmul %4, %5, %cst {dimension_numbers = #tpu.dot_dimension_numbers<[1], [0], [0], [1], [0, 0, 1, 1], [], []>} : vector<2x256xf32>, vector<256x16xf32>, vector<2x16xf32> -> vector<2x16xf32>
    %7 = arith.addf %3, %6 : vector<2x16xf32>
    %c0_6 = arith.constant 0 : index
    %c0_7 = arith.constant 0 : index
    %8 = vector.load %arg7[%c0_6, %c0_7] : memref<2x16xf32, #tpu.memory_space<vmem>>, vector<2x16xf32>
    tpu.vector_store %arg7[%c0_6, %c0_7], %7 {strides = array<i32>} : memref<2x16xf32, #tpu.memory_space<vmem>>, vector<2x16xf32>,
    %c0_i32_8 = arith.constant 0 : i32
    %9 = arith.cmpi eq, %arg2, %c0_i32_8 : i32
    %10 = arith.extui %9 : i1 to i32
    %c0_i32_9 = arith.constant 0 : i32
    %11 = arith.cmpi ne, %10, %c0_i32_9 : i32
    scf.if %11 {
      %c0_10 = arith.constant 0 : index
      %c0_11 = arith.constant 0 : index
      %12 = vector.load %arg7[%c0_10, %c0_11] : memref<2x16xf32, #tpu.memory_space<vmem>>, vector<2x16xf32>
      %c0_12 = arith.constant 0 : index
      %c0_13 = arith.constant 0 : index
      %13 = vector.load %arg5[%c0_12, %c0_13] : memref<1x16xf32, #tpu.memory_space<vmem>>, vector<1x16xf32>
      %14 = vector.broadcast %13 : vector<1x16xf32> to vector<2x16xf32>
      %15 = arith.addf %12, %14 : vector<2x16xf32>
      %c0_14 = arith.constant 0 : index
      %c0_15 = arith.constant 0 : index
      %16 = vector.load %arg6[%c0_14, %c0_15] : memref<2x16xf32, #tpu.memory_space<vmem>>, vector<2x16xf32>
      tpu.vector_store %arg6[%c0_14, %c0_15], %15 {strides = array<i32>} : memref<2x16xf32, #tpu.memory_space<vmem>>, vector<2x16xf32>,
    } else {
    }
    return
  }
  func.func @transform_0(%arg0: i32, %arg1: i32, %arg2: i32) -> (i32, i32) {
    %c0_i32 = arith.constant 0 : i32
    return %arg0, %arg2 : i32, i32
  }
  func.func @transform_1(%arg0: i32, %arg1: i32, %arg2: i32) -> (i32, i32) {
    %c0_i32 = arith.constant 0 : i32
    return %arg2, %arg1 : i32, i32
  }
  func.func @transform_2(%arg0: i32, %arg1: i32, %arg2: i32) -> (i32, i32) {
    %c0_i32 = arith.constant 0 : i32
    %c0_i32_0 = arith.constant 0 : i32
    return %c0_i32, %arg1 : i32, i32
  }
  func.func @transform_3(%arg0: i32, %arg1: i32, %arg2: i32) -> (i32, i32) {
    %c0_i32 = arith.constant 0 : i32
    return %arg0, %arg1 : i32, i32
  }
}

module attributes {stable_mosaic.version = 11 : i64} {
  func.func @_fused_block_kernel(%arg0: memref<8x64xf32, #tpu.memory_space<vmem>>, %arg1: memref<64x64xf32, #tpu.memory_space<vmem>>, %arg2: memref<3x64x64xf32, #tpu.memory_space<vmem>>, %arg3: memref<8x8xf32, #tpu.memory_space<vmem>>, %arg4: memref<8x1xf32, #tpu.memory_space<vmem>>, %arg5: memref<3x8x8xf32, #tpu.memory_space<vmem>>, %arg6: memref<8x1xf32, #tpu.memory_space<vmem>>, %arg7: memref<64x64xf32, #tpu.memory_space<vmem>>, %arg8: memref<1x64xf32, #tpu.memory_space<vmem>>, %arg9: memref<8x64xf32, #tpu.memory_space<vmem>>) attributes {dimension_semantics = [], scalar_prefetch = 0 : i64, scratch_operands = 0 : i64, tpu.core_type = #tpu.core_type<tc>} {
    %c0 = arith.constant 0 : index
    %c0_0 = arith.constant 0 : index
    %0 = vector.load %arg3[%c0, %c0_0] : memref<8x8xf32, #tpu.memory_space<vmem>>, vector<8x8xf32>
    %c0_1 = arith.constant 0 : index
    %c0_2 = arith.constant 0 : index
    %1 = vector.load %arg0[%c0_1, %c0_2] : memref<8x64xf32, #tpu.memory_space<vmem>>, vector<8x64xf32>
    %cst = arith.constant dense<0.000000e+00> : vector<8x64xf32>
    %2 = tpu.matmul %0, %1, %cst {dimension_numbers = #tpu.dot_dimension_numbers<[1], [0], [0], [1], [0, 0, 1, 1], [], []>} : vector<8x8xf32>, vector<8x64xf32>, vector<8x64xf32> -> vector<8x64xf32>
    %c0_3 = arith.constant 0 : index
    %c0_4 = arith.constant 0 : index
    %3 = vector.load %arg1[%c0_3, %c0_4] : memref<64x64xf32, #tpu.memory_space<vmem>>, vector<64x64xf32>
    %cst_5 = arith.constant dense<0.000000e+00> : vector<8x64xf32>
    %4 = tpu.matmul %2, %3, %cst_5 {dimension_numbers = #tpu.dot_dimension_numbers<[1], [0], [0], [1], [0, 0, 1, 1], [], []>} : vector<8x64xf32>, vector<64x64xf32>, vector<8x64xf32> -> vector<8x64xf32>
    %c0_6 = arith.constant 0 : index
    %c0_7 = arith.constant 0 : index
    %5 = vector.load %arg4[%c0_6, %c0_7] : memref<8x1xf32, #tpu.memory_space<vmem>>, vector<8x1xf32>
    %6 = vector.broadcast %5 : vector<8x1xf32> to vector<8x64xf32>
    %7 = arith.addf %4, %6 : vector<8x64xf32>
    %cst_8 = arith.constant 0.000000e+00 : f32
    %8 = vector.broadcast %cst_8 : f32 to vector<8x64xf32>
    %9 = arith.maximumf %7, %8 : vector<8x64xf32>
    %cst_9 = arith.constant 0.000000e+00 : f32
    %10 = vector.broadcast %cst_9 : f32 to vector<8x64xf32>
    %c0_10 = arith.constant 0 : index
    %c0_11 = arith.constant 0 : index
    %c0_12 = arith.constant 0 : index
    %11 = vector.load %arg5[%c0_10, %c0_11, %c0_12] : memref<3x8x8xf32, #tpu.memory_space<vmem>>, vector<1x8x8xf32>
    %12 = vector.shape_cast %11 : vector<1x8x8xf32> to vector<8x8xf32>
    %c0_13 = arith.constant 0 : index
    %c0_14 = arith.constant 0 : index
    %c0_15 = arith.constant 0 : index
    %13 = vector.load %arg2[%c0_13, %c0_14, %c0_15] : memref<3x64x64xf32, #tpu.memory_space<vmem>>, vector<1x64x64xf32>
    %14 = vector.shape_cast %13 : vector<1x64x64xf32> to vector<64x64xf32>
    %cst_16 = arith.constant dense<0.000000e+00> : vector<8x64xf32>
    %15 = tpu.matmul %9, %14, %cst_16 {dimension_numbers = #tpu.dot_dimension_numbers<[1], [0], [0], [1], [0, 0, 1, 1], [], []>} : vector<8x64xf32>, vector<64x64xf32>, vector<8x64xf32> -> vector<8x64xf32>
    %cst_17 = arith.constant dense<0.000000e+00> : vector<8x64xf32>
    %16 = tpu.matmul %12, %15, %cst_17 {dimension_numbers = #tpu.dot_dimension_numbers<[1], [0], [0], [1], [0, 0, 1, 1], [], []>} : vector<8x8xf32>, vector<8x64xf32>, vector<8x64xf32> -> vector<8x64xf32>
    %17 = arith.addf %10, %16 : vector<8x64xf32>
    %c1 = arith.constant 1 : index
    %c0_18 = arith.constant 0 : index
    %c0_19 = arith.constant 0 : index
    %18 = vector.load %arg5[%c1, %c0_18, %c0_19] : memref<3x8x8xf32, #tpu.memory_space<vmem>>, vector<1x8x8xf32>
    %19 = vector.shape_cast %18 : vector<1x8x8xf32> to vector<8x8xf32>
    %c1_20 = arith.constant 1 : index
    %c0_21 = arith.constant 0 : index
    %c0_22 = arith.constant 0 : index
    %20 = vector.load %arg2[%c1_20, %c0_21, %c0_22] : memref<3x64x64xf32, #tpu.memory_space<vmem>>, vector<1x64x64xf32>
    %21 = vector.shape_cast %20 : vector<1x64x64xf32> to vector<64x64xf32>
    %cst_23 = arith.constant dense<0.000000e+00> : vector<8x64xf32>
    %22 = tpu.matmul %9, %21, %cst_23 {dimension_numbers = #tpu.dot_dimension_numbers<[1], [0], [0], [1], [0, 0, 1, 1], [], []>} : vector<8x64xf32>, vector<64x64xf32>, vector<8x64xf32> -> vector<8x64xf32>
    %cst_24 = arith.constant dense<0.000000e+00> : vector<8x64xf32>
    %23 = tpu.matmul %19, %22, %cst_24 {dimension_numbers = #tpu.dot_dimension_numbers<[1], [0], [0], [1], [0, 0, 1, 1], [], []>} : vector<8x8xf32>, vector<8x64xf32>, vector<8x64xf32> -> vector<8x64xf32>
    %24 = arith.addf %17, %23 : vector<8x64xf32>
    %c2 = arith.constant 2 : index
    %c0_25 = arith.constant 0 : index
    %c0_26 = arith.constant 0 : index
    %25 = vector.load %arg5[%c2, %c0_25, %c0_26] : memref<3x8x8xf32, #tpu.memory_space<vmem>>, vector<1x8x8xf32>
    %26 = vector.shape_cast %25 : vector<1x8x8xf32> to vector<8x8xf32>
    %c2_27 = arith.constant 2 : index
    %c0_28 = arith.constant 0 : index
    %c0_29 = arith.constant 0 : index
    %27 = vector.load %arg2[%c2_27, %c0_28, %c0_29] : memref<3x64x64xf32, #tpu.memory_space<vmem>>, vector<1x64x64xf32>
    %28 = vector.shape_cast %27 : vector<1x64x64xf32> to vector<64x64xf32>
    %cst_30 = arith.constant dense<0.000000e+00> : vector<8x64xf32>
    %29 = tpu.matmul %9, %28, %cst_30 {dimension_numbers = #tpu.dot_dimension_numbers<[1], [0], [0], [1], [0, 0, 1, 1], [], []>} : vector<8x64xf32>, vector<64x64xf32>, vector<8x64xf32> -> vector<8x64xf32>
    %cst_31 = arith.constant dense<0.000000e+00> : vector<8x64xf32>
    %30 = tpu.matmul %26, %29, %cst_31 {dimension_numbers = #tpu.dot_dimension_numbers<[1], [0], [0], [1], [0, 0, 1, 1], [], []>} : vector<8x8xf32>, vector<8x64xf32>, vector<8x64xf32> -> vector<8x64xf32>
    %31 = arith.addf %24, %30 : vector<8x64xf32>
    %c0_32 = arith.constant 0 : index
    %c0_33 = arith.constant 0 : index
    %32 = vector.load %arg6[%c0_32, %c0_33] : memref<8x1xf32, #tpu.memory_space<vmem>>, vector<8x1xf32>
    %33 = vector.broadcast %32 : vector<8x1xf32> to vector<8x64xf32>
    %34 = arith.addf %31, %33 : vector<8x64xf32>
    %cst_34 = arith.constant 0.000000e+00 : f32
    %35 = vector.broadcast %cst_34 : f32 to vector<8x64xf32>
    %36 = arith.maximumf %34, %35 : vector<8x64xf32>
    %c0_35 = arith.constant 0 : index
    %c0_36 = arith.constant 0 : index
    %37 = vector.load %arg7[%c0_35, %c0_36] : memref<64x64xf32, #tpu.memory_space<vmem>>, vector<64x64xf32>
    %cst_37 = arith.constant dense<0.000000e+00> : vector<8x64xf32>
    %38 = tpu.matmul %36, %37, %cst_37 {dimension_numbers = #tpu.dot_dimension_numbers<[1], [0], [0], [1], [0, 0, 1, 1], [], []>} : vector<8x64xf32>, vector<64x64xf32>, vector<8x64xf32> -> vector<8x64xf32>
    %c0_38 = arith.constant 0 : index
    %c0_39 = arith.constant 0 : index
    %39 = vector.load %arg8[%c0_38, %c0_39] : memref<1x64xf32, #tpu.memory_space<vmem>>, vector<1x64xf32>
    %40 = vector.broadcast %39 : vector<1x64xf32> to vector<8x64xf32>
    %41 = arith.addf %38, %40 : vector<8x64xf32>
    %c0_40 = arith.constant 0 : index
    %c0_41 = arith.constant 0 : index
    %42 = vector.load %arg9[%c0_40, %c0_41] : memref<8x64xf32, #tpu.memory_space<vmem>>, vector<8x64xf32>
    tpu.vector_store %arg9[%c0_40, %c0_41], %41 {strides = array<i32>} : memref<8x64xf32, #tpu.memory_space<vmem>>, vector<8x64xf32>,
    return
  }
}

</mosaic_0001>

<llo_original>
// kernel: _forward_impl.3
$region0: #{_forward_impl.3}
  #allocation0 [shape = 'u32[]', space=smem, size = 0x4, offset = 0x4, fixed_abs, tag = 'smem constant byte address 0x4 - core index']
  #allocation1 [shape = 'u32[144,128]{1,0:T(1,128)}', space=vmem, size = 0x12000, scoped, tag = 'internal scratch']
  #allocation2 [shape = 'f32[2,16]{1,0:T(2,128)}', space=vmem, size = 0x400, scoped, tag = 'scratch operand']
  %s0 = inlined_call_operand.vmem [shape: f32[2,256], index: 0, kind: input, shape index: {}]
  %s1 = inlined_call_operand.vmem [shape: f32[256,16], index: 1, kind: input, shape index: {}]
  %s2 = inlined_call_operand.vmem [shape: f32[1,16], index: 2, kind: input, shape index: {}]
  %s3 = inlined_call_operand.vmem [shape: f32[2,16], index: 3, kind: output, shape index: {}]
  %s4 = sld [smem:[#allocation0]]
  $region30: #{_forward_impl.3} parent=0
    _
  %s6 = ssub.s32 1, %s4
  %s7 = scalar_select 0, %s6, %s4
  // Predicated region
  $region2: #{_forward_impl.3} parent=0 // pred_check
    _
  $region3: #{_forward_impl.3} parent=0 // pred_check_branch
    %9 = sbr.rel (0) target = $region5
  $region4: #{_forward_impl.3} parent=0 // pred_region
    _
  $region5: #{_forward_impl.3} parent=0 // pred_fallthru
    _
  // Predicated region
  $region6: #{_forward_impl.3} parent=0 // pred_check
    _
  $region7: #{_forward_impl.3} parent=0 // pred_check_branch
    %11 = sbr.rel (0) target = $region9
  $region8: #{_forward_impl.3} parent=0 // pred_region
    _
  $region9: #{_forward_impl.3} parent=0 // pred_fallthru
    _
  // Predicated region
  $region10: #{_forward_impl.3} parent=0 // pred_check
    _
  $region11: #{_forward_impl.3} parent=0 // pred_check_branch
    %13 = sbr.rel (0) target = $region13
  $region12: #{_forward_impl.3} parent=0 // pred_region
    _
  $region13: #{_forward_impl.3} parent=0 // pred_fallthru
    _
  %p14 = scmp.eq.s32.totalorder 0, 0
  // Predicated region
  $region14: #{_forward_impl.3} parent=0 // pred_check
    %p15 = pneg %p14
  $region15: #{_forward_impl.3} parent=0 // pred_check_branch
    %17 = sbr.rel (%p15) target = $region17
  $region16: #{_forward_impl.3} parent=0 // pred_region
    %vm18 = vcmask 123904
    %19 = vst.msk [vmem:[#allocation2] sm:$0x3] %vm18, 0.0
  $region17: #{_forward_impl.3} parent=0 // pred_fallthru
    _
  %v20 = vld [vmem:[#allocation2] sm:$0x3]
  %v21 = vld [vmem:[%s0] sm:$0xf]
  %v22 = vld [vmem:[%s1] sm:$0xff]
  %v23 = vld [vmem:[%s1 + $0x8] sm:$0xff]
  %v24 = vld [vmem:[%s1 + $0x10] sm:$0xff]
  %v25 = vld [vmem:[%s1 + $0x18] sm:$0xff]
  %v26 = vld [vmem:[%s1 + $0x20] sm:$0xff]
  %v27 = vld [vmem:[%s1 + $0x28] sm:$0xff]
  %v28 = vld [vmem:[%s1 + $0x30] sm:$0xff]
  %v29 = vld [vmem:[%s1 + $0x38] sm:$0xff]
  %v30 = vld [vmem:[%s1 + $0x40] sm:$0xff]
  %v31 = vld [vmem:[%s1 + $0x48] sm:$0xff]
  %v32 = vld [vmem:[%s1 + $0x50] sm:$0xff]
  %v33 = vld [vmem:[%s1 + $0x58] sm:$0xff]
  %v34 = vld [vmem:[%s1 + $0x60] sm:$0xff]
  %v35 = vld [vmem:[%s1 + $0x68] sm:$0xff]
  %v36 = vld [vmem:[%s1 + $0x70] sm:$0xff]
  %v37 = vld [vmem:[%s1 + $0x78] sm:$0xff]
  %v38 = vld [vmem:[%s1 + $0x80] sm:$0xff]
  %v39 = vld [vmem:[%s1 + $0x88] sm:$0xff]
  %v40 = vld [vmem:[%s1 + $0x90] sm:$0xff]
  %v41 = vld [vmem:[%s1 + $0x98] sm:$0xff]
  %v42 = vld [vmem:[%s1 + $0xa0] sm:$0xff]
  %v43 = vld [vmem:[%s1 + $0xa8] sm:$0xff]
  %v44 = vld [vmem:[%s1 + $0xb0] sm:$0xff]
  %v45 = vld [vmem:[%s1 + $0xb8] sm:$0xff]
  %v46 = vld [vmem:[%s1 + $0xc0] sm:$0xff]
  %v47 = vld [vmem:[%s1 + $0xc8] sm:$0xff]
  %v48 = vld [vmem:[%s1 + $0xd0] sm:$0xff]
  %v49 = vld [vmem:[%s1 + $0xd8] sm:$0xff]
  %v50 = vld [vmem:[%s1 + $0xe0] sm:$0xff]
  %v51 = vld [vmem:[%s1 + $0xe8] sm:$0xff]
  %v52 = vld [vmem:[%s1 + $0xf0] sm:$0xff]
  %v53 = vld [vmem:[%s1 + $0xf8] sm:$0xff]
  %v56 = vunpack.c.l.s4 1983009808
  %v57 = vunpack.c.0.s8 %v56
  %v58 = vlaneseq
  %v59 = vshrl.u32 %v58, 7
  %v60 = vsub.s32 %v57, %v59
  %v61 = vrot.slane %v21, %v60
  %v62 = vcombine.high %v61, %v61
  %65 = vmatprep.subr.mxu0 0.0
  %66 = vmatpush1.msra.mxu0 %v37
  %67 = vmatprep.subr.mxu0 0.0
  %68 = vmatpush1.msra.mxu0 %v36
  %69 = vmatprep.subr.mxu0 0.0
  %70 = vmatpush1.msra.mxu0 %v35
  %71 = vmatprep.subr.mxu0 0.0
  %72 = vmatpush1.msra.mxu0 %v34
  %73 = vmatprep.subr.mxu0 0.0
  %74 = vmatpush1.msra.mxu0 %v33
  %75 = vmatprep.subr.mxu0 0.0
  %76 = vmatpush1.msra.mxu0 %v32
  %77 = vmatprep.subr.mxu0 0.0
  %78 = vmatpush1.msra.mxu0 %v31
  %79 = vmatprep.subr.mxu0 0.0
  %80 = vmatpush1.msra.mxu0 %v30
  %81 = vmatprep.subr.mxu0 0.0
  %82 = vmatpush1.msra.mxu0 %v29
  %83 = vmatprep.subr.mxu0 0.0
  %84 = vmatpush1.msra.mxu0 %v28
  %85 = vmatprep.subr.mxu0 0.0
  %86 = vmatpush1.msra.mxu0 %v27
  %87 = vmatprep.subr.mxu0 0.0
  %88 = vmatpush1.msra.mxu0 %v26
  %89 = vmatprep.subr.mxu0 0.0
  %90 = vmatpush1.msra.mxu0 %v25
  %91 = vmatprep.subr.mxu0 0.0
  %92 = vmatpush1.msra.mxu0 %v24
  %93 = vmatprep.subr.mxu0 0.0
  %94 = vmatpush1.msra.mxu0 %v23
  %95 = vmatprep.subr.mxu0 0.0
  %96 = vmatpush1.msra.mxu0 %v22
  %97 = vmatprep.subr.mxu0 0.0
  %98 = vmatpush2.msra.mxu0 %v53
  %99 = vmatprep.subr.mxu0 0.0
  %100 = vmatpush2.msra.mxu0 %v52
  %101 = vmatprep.subr.mxu0 0.0
  %102 = vmatpush2.msra.mxu0 %v51
  %103 = vmatprep.subr.mxu0 0.0
  %104 = vmatpush2.msra.mxu0 %v50
  %105 = vmatprep.subr.mxu0 0.0
  %106 = vmatpush2.msra.mxu0 %v49
  %107 = vmatprep.subr.mxu0 0.0
  %108 = vmatpush2.msra.mxu0 %v48
  %109 = vmatprep.subr.mxu0 0.0
  %110 = vmatpush2.msra.mxu0 %v47
  %111 = vmatprep.subr.mxu0 0.0
  %112 = vmatpush2.msra.mxu0 %v46
  %113 = vmatprep.subr.mxu0 0.0
  %114 = vmatpush2.msra.mxu0 %v45
  %115 = vmatprep.subr.mxu0 0.0
  %116 = vmatpush2.msra.mxu0 %v44
  %117 = vmatprep.subr.mxu0 0.0
  %118 = vmatpush2.msra.mxu0 %v43
  %119 = vmatprep.subr.mxu0 0.0
  %120 = vmatpush2.msra.mxu0 %v42
  %121 = vmatprep.subr.mxu0 0.0
  %122 = vmatpush2.msra.mxu0 %v41
  %123 = vmatprep.subr.mxu0 0.0
  %124 = vmatpush2.msra.mxu0 %v40
  %125 = vmatprep.subr.mxu0 0.0
  %126 = vmatpush2.msra.mxu0 %v39
  %127 = vmatprep.subr.mxu0 0.0
  %128 = vmatpush2.msra.mxu0 %v38
  %129 = vmatprep.mubr.f32.mxu0 %v62
  %130 = vmatmul.mubr.f32.gmra.mxu0 %v61
  %v131 = vpop.f32.mrf.mxu0
  %v132 = vadd.f32 0.0, %v131
  %v133 = vpop.f32.mrf.mxu0
  %134 = vdwg.mxu0
  %v135 = vadd.f32 %v20, %v132
  %vm136 = vcmask 123904
  %137 = vst.msk [vmem:[#allocation2] sm:$0x3] %vm136, %v135
  // Predicated region
  $region18: #{_forward_impl.3} parent=0 // pred_check
    %p138 = pneg %p14
  $region19: #{_forward_impl.3} parent=0 // pred_check_branch
    %140 = sbr.rel (%p138) target = $region21
  $region20: #{_forward_impl.3} parent=0 // pred_region
    %v141 = vld [vmem:[#allocation2] sm:$0x3]
    %v142 = vld [vmem:[%s2] sm:$0x1]
    %v144 = vlaneseq
    %v145 = vshrl.u32 %v144, 7
    %v146 = vsub.s32 0, %v145
    %v147 = vrot.slane %v142, %v146
    %v149 = vadd.f32 %v141, %v147
    %150 = vst.msk [vmem:[%s3] sm:$0x3] %vm136, %v149
  $region21: #{_forward_impl.3} parent=0 // pred_fallthru
    _
  // Predicated region
  $region22: #{_forward_impl.3} parent=0 // pred_check
    _
  $region23: #{_forward_impl.3} parent=0 // pred_check_branch
    %152 = sbr.rel (0) target = $region25
  $region24: #{_forward_impl.3} parent=0 // pred_region
    _
  $region25: #{_forward_impl.3} parent=0 // pred_fallthru
    _
  // Predicated region
  $region26: #{_forward_impl.3} parent=0 // pred_check
    _
  $region27: #{_forward_impl.3} parent=0 // pred_check_branch
    %154 = sbr.rel (0) target = $region29
  $region28: #{_forward_impl.3} parent=0 // pred_region
    _
  $region29: #{_forward_impl.3} parent=0 // pred_fallthru
    _

// kernel: _forward_impl.2
$region0: #{_forward_impl.2}
  #allocation0 [shape = 'u32[]', space=smem, size = 0x4, offset = 0x4, fixed_abs, tag = 'smem constant byte address 0x4 - core index']
  #allocation1 [shape = 'u32[144,128]{1,0:T(1,128)}', space=vmem, size = 0x12000, scoped, tag = 'internal scratch']
  %s0 = inlined_call_operand.vmem [shape: f32[8,64], index: 0, kind: input, shape index: {}]
  %s1 = inlined_call_operand.vmem [shape: f32[64,64], index: 1, kind: input, shape index: {}]
  %s2 = inlined_call_operand.vmem [shape: f32[3,64,64], index: 2, kind: input, shape index: {}]
  %s3 = inlined_call_operand.vmem [shape: f32[8,8], index: 3, kind: input, shape index: {}]
  %s4 = inlined_call_operand.vmem [shape: f32[8,1], index: 4, kind: input, shape index: {}]
  %s5 = inlined_call_operand.vmem [shape: f32[3,8,8], index: 5, kind: input, shape index: {}]
  %s6 = inlined_call_operand.vmem [shape: f32[8,1], index: 6, kind: input, shape index: {}]
  %s7 = inlined_call_operand.vmem [shape: f32[64,64], index: 7, kind: input, shape index: {}]
  %s8 = inlined_call_operand.vmem [shape: f32[1,64], index: 8, kind: input, shape index: {}]
  %s9 = inlined_call_operand.vmem [shape: f32[8,64], index: 9, kind: output, shape index: {}]
  %s10 = sld [smem:[#allocation0]]
  $region46: #{_forward_impl.2} parent=0
    _
  %s12 = ssub.s32 1, %s10
  %s13 = scalar_select 0, %s12, %s10
  // Predicated region
  $region2: #{_forward_impl.2} parent=0 // pred_check
    _
  $region3: #{_forward_impl.2} parent=0 // pred_check_branch
    %15 = sbr.rel (0) target = $region5
  $region4: #{_forward_impl.2} parent=0 // pred_region
    _
  $region5: #{_forward_impl.2} parent=0 // pred_fallthru
    _
  // Predicated region
  $region6: #{_forward_impl.2} parent=0 // pred_check
    _
  $region7: #{_forward_impl.2} parent=0 // pred_check_branch
    %17 = sbr.rel (0) target = $region9
  $region8: #{_forward_impl.2} parent=0 // pred_region
    _
  $region9: #{_forward_impl.2} parent=0 // pred_fallthru
    _
  // Predicated region
  $region10: #{_forward_impl.2} parent=0 // pred_check
    _
  $region11: #{_forward_impl.2} parent=0 // pred_check_branch
    %19 = sbr.rel (0) target = $region13
  $region12: #{_forward_impl.2} parent=0 // pred_region
    _
  $region13: #{_forward_impl.2} parent=0 // pred_fallthru
    _
  // Predicated region
  $region14: #{_forward_impl.2} parent=0 // pred_check
    _
  $region15: #{_forward_impl.2} parent=0 // pred_check_branch
    %21 = sbr.rel (0) target = $region17
  $region16: #{_forward_impl.2} parent=0 // pred_region
    _
  $region17: #{_forward_impl.2} parent=0 // pred_fallthru
    _
  // Predicated region
  $region18: #{_forward_impl.2} parent=0 // pred_check
    _
  $region19: #{_forward_impl.2} parent=0 // pred_check_branch
    %23 = sbr.rel (0) target = $region21
  $region20: #{_forward_impl.2} parent=0 // pred_region
    _
  $region21: #{_forward_impl.2} parent=0 // pred_fallthru
    _
  // Predicated region
  $region22: #{_forward_impl.2} parent=0 // pred_check
    _
  $region23: #{_forward_impl.2} parent=0 // pred_check_branch
    %25 = sbr.rel (0) target = $region25
  $region24: #{_forward_impl.2} parent=0 // pred_region
    _
  $region25: #{_forward_impl.2} parent=0 // pred_fallthru
    _
  // Predicated region
  $region26: #{_forward_impl.2} parent=0 // pred_check
    _
  $region27: #{_forward_impl.2} parent=0 // pred_check_branch
    %27 = sbr.rel (0) target = $region29
  $region28: #{_forward_impl.2} parent=0 // pred_region
    _
  $region29: #{_forward_impl.2} parent=0 // pred_fallthru
    _
  // Predicated region
  $region30: #{_forward_impl.2} parent=0 // pred_check
    _
  $region31: #{_forward_impl.2} parent=0 // pred_check_branch
    %29 = sbr.rel (0) target = $region33
  $region32: #{_forward_impl.2} parent=0 // pred_region
    _
  $region33: #{_forward_impl.2} parent=0 // pred_fallthru
    _
  // Predicated region
  $region34: #{_forward_impl.2} parent=0 // pred_check
    _
  $region35: #{_forward_impl.2} parent=0 // pred_check_branch
    %31 = sbr.rel (0) target = $region37
  $region36: #{_forward_impl.2} parent=0 // pred_region
    _
  $region37: #{_forward_impl.2} parent=0 // pred_fallthru
    _
  %v32 = vld [vmem:[%s3] sm:$0xff]
  %v33 = vld [vmem:[%s0] sm:$0xff]
  %vm34 = vcmask 64512
  %v36 = vsel %vm34, %v32, 0
  %38 = vmatprep.subr.mxu0 0.0
  %39 = vmatpush1.msra.mxu0 0.0
  %40 = vmatprep.subr.mxu0 0.0
  %41 = vmatpush1.msra.mxu0 0.0
  %42 = vmatprep.subr.mxu0 0.0
  %43 = vmatpush1.msra.mxu0 0.0
  %44 = vmatprep.subr.mxu0 0.0
  %45 = vmatpush1.msra.mxu0 0.0
  %46 = vmatprep.subr.mxu0 0.0
  %47 = vmatpush1.msra.mxu0 0.0
  %48 = vmatprep.subr.mxu0 0.0
  %49 = vmatpush1.msra.mxu0 0.0
  %50 = vmatprep.subr.mxu0 0.0
  %51 = vmatpush1.msra.mxu0 0.0
  %52 = vmatprep.subr.mxu0 0.0
  %53 = vmatpush1.msra.mxu0 0.0
  %54 = vmatprep.subr.mxu0 0.0
  %55 = vmatpush1.msra.mxu0 0.0
  %56 = vmatprep.subr.mxu0 0.0
  %57 = vmatpush1.msra.mxu0 0.0
  %58 = vmatprep.subr.mxu0 0.0
  %59 = vmatpush1.msra.mxu0 0.0
  %60 = vmatprep.subr.mxu0 0.0
  %61 = vmatpush1.msra.mxu0 0.0
  %62 = vmatprep.subr.mxu0 0.0
  %63 = vmatpush1.msra.mxu0 0.0
  %64 = vmatprep.subr.mxu0 0.0
  %65 = vmatpush1.msra.mxu0 0.0
  %66 = vmatprep.subr.mxu0 0.0
  %67 = vmatpush1.msra.mxu0 0.0
  %68 = vmatprep.subr.mxu0 0.0
  %69 = vmatpush1.msra.mxu0 %v33
  %70 = vmatprep.subr.mxu0 0.0
  %71 = vmatpush2.msra.mxu0 0.0
  %72 = vmatprep.subr.mxu0 0.0
  %73 = vmatpush2.msra.mxu0 0.0
  %74 = vmatprep.subr.mxu0 0.0
  %75 = vmatpush2.msra.mxu0 0.0
  %76 = vmatprep.subr.mxu0 0.0
  %77 = vmatpush2.msra.mxu0 0.0
  %78 = vmatprep.subr.mxu0 0.0
  %79 = vmatpush2.msra.mxu0 0.0
  %80 = vmatprep.subr.mxu0 0.0
  %81 = vmatpush2.msra.mxu0 0.0
  %82 = vmatprep.subr.mxu0 0.0
  %83 = vmatpush2.msra.mxu0 0.0
  %84 = vmatprep.subr.mxu0 0.0
  %85 = vmatpush2.msra.mxu0 0.0
  %86 = vmatprep.subr.mxu0 0.0
  %87 = vmatpush2.msra.mxu0 0.0
  %88 = vmatprep.subr.mxu0 0.0
  %89 = vmatpush2.msra.mxu0 0.0
  %90 = vmatprep.subr.mxu0 0.0
  %91 = vmatpush2.msra.mxu0 0.0
  %92 = vmatprep.subr.mxu0 0.0
  %93 = vmatpush2.msra.mxu0 0.0
  %94 = vmatprep.subr.mxu0 0.0
  %95 = vmatpush2.msra.mxu0 0.0
  %96 = vmatprep.subr.mxu0 0.0
  %97 = vmatpush2.msra.mxu0 0.0
  %98 = vmatprep.subr.mxu0 0.0
  %99 = vmatpush2.msra.mxu0 0.0
  %100 = vmatprep.subr.mxu0 0.0
  %101 = vmatpush2.msra.mxu0 0.0
  %102 = vmatprep.mubr.f32.mxu0 0.0
  %103 = vmatmul.mubr.f32.gmra.mxu0 %v36
  %v104 = vpop.f32.mrf.mxu0
  %v105 = vadd.f32 0.0, %v104
  %v106 = vpop.f32.mrf.mxu0
  %107 = vdwg.mxu0
  %v108 = vld [vmem:[%s1] sm:$0xff]
  %v109 = vld [vmem:[%s1 + $0x8] sm:$0xff]
  %v110 = vld [vmem:[%s1 + $0x10] sm:$0xff]
  %v111 = vld [vmem:[%s1 + $0x18] sm:$0xff]
  %v112 = vld [vmem:[%s1 + $0x20] sm:$0xff]
  %v113 = vld [vmem:[%s1 + $0x28] sm:$0xff]
  %v114 = vld [vmem:[%s1 + $0x30] sm:$0xff]
  %v115 = vld [vmem:[%s1 + $0x38] sm:$0xff]
  %v116 = vld [vmem:[%s4] sm:$0xff]
  %118 = vset.pattern.permute.xlu0 0
  %119 = vperm.xlu0 %118, %v116
  %v120 = vpop.permute.xlu0 %119
  %vm122 = vcmask 523264
  %v124 = vsel %vm122, %v105, 0
  %126 = vmatprep.subr.mxu0 0.0
  %127 = vmatpush1.msra.mxu0 0.0
  %128 = vmatprep.subr.mxu0 0.0
  %129 = vmatpush1.msra.mxu0 0.0
  %130 = vmatprep.subr.mxu0 0.0
  %131 = vmatpush1.msra.mxu0 0.0
  %132 = vmatprep.subr.mxu0 0.0
  %133 = vmatpush1.msra.mxu0 0.0
  %134 = vmatprep.subr.mxu0 0.0
  %135 = vmatpush1.msra.mxu0 0.0
  %136 = vmatprep.subr.mxu0 0.0
  %137 = vmatpush1.msra.mxu0 0.0
  %138 = vmatprep.subr.mxu0 0.0
  %139 = vmatpush1.msra.mxu0 0.0
  %140 = vmatprep.subr.mxu0 0.0
  %141 = vmatpush1.msra.mxu0 0.0
  %142 = vmatprep.subr.mxu0 0.0
  %143 = vmatpush1.msra.mxu0 %v115
  %144 = vmatprep.subr.mxu0 0.0
  %145 = vmatpush1.msra.mxu0 %v114
  %146 = vmatprep.subr.mxu0 0.0
  %147 = vmatpush1.msra.mxu0 %v113
  %148 = vmatprep.subr.mxu0 0.0
  %149 = vmatpush1.msra.mxu0 %v112
  %150 = vmatprep.subr.mxu0 0.0
  %151 = vmatpush1.msra.mxu0 %v111
  %152 = vmatprep.subr.mxu0 0.0
  %153 = vmatpush1.msra.mxu0 %v110
  %154 = vmatprep.subr.mxu0 0.0
  %155 = vmatpush1.msra.mxu0 %v109
  %156 = vmatprep.subr.mxu0 0.0
  %157 = vmatpush1.msra.mxu0 %v108
  %158 = vmatprep.subr.mxu0 0.0
  %159 = vmatpush2.msra.mxu0 0.0
  %160 = vmatprep.subr.mxu0 0.0
  %161 = vmatpush2.msra.mxu0 0.0
  %162 = vmatprep.subr.mxu0 0.0
  %163 = vmatpush2.msra.mxu0 0.0
  %164 = vmatprep.subr.mxu0 0.0
  %165 = vmatpush2.msra.mxu0 0.0
  %166 = vmatprep.subr.mxu0 0.0
  %167 = vmatpush2.msra.mxu0 0.0
  %168 = vmatprep.subr.mxu0 0.0
  %169 = vmatpush2.msra.mxu0 0.0
  %170 = vmatprep.subr.mxu0 0.0
  %171 = vmatpush2.msra.mxu0 0.0
  %172 = vmatprep.subr.mxu0 0.0
  %173 = vmatpush2.msra.mxu0 0.0
  %174 = vmatprep.subr.mxu0 0.0
  %175 = vmatpush2.msra.mxu0 0.0
  %176 = vmatprep.subr.mxu0 0.0
  %177 = vmatpush2.msra.mxu0 0.0
  %178 = vmatprep.subr.mxu0 0.0
  %179 = vmatpush2.msra.mxu0 0.0
  %180 = vmatprep.subr.mxu0 0.0
  %181 = vmatpush2.msra.mxu0 0.0
  %182 = vmatprep.subr.mxu0 0.0
  %183 = vmatpush2.msra.mxu0 0.0
  %184 = vmatprep.subr.mxu0 0.0
  %185 = vmatpush2.msra.mxu0 0.0
  %186 = vmatprep.subr.mxu0 0.0
  %187 = vmatpush2.msra.mxu0 0.0
  %188 = vmatprep.subr.mxu0 0.0
  %189 = vmatpush2.msra.mxu0 0.0
  %190 = vmatprep.mubr.f32.mxu0 0.0
  %191 = vmatmul.mubr.f32.gmra.mxu0 %v124
  %v192 = vpop.f32.mrf.mxu0
  %v193 = vadd.f32 %v120, %v192
  %v194 = vpop.f32.mrf.mxu0
  %195 = vdwg.mxu0
  %v196 = vmax.f32 %v193, 0.0
  %v197 = vld [vmem:[%s5] sm:$0xff]
  %v198 = vld [vmem:[%s2] sm:$0xff]
  %v199 = vld [vmem:[%s2 + $0x8] sm:$0xff]
  %v200 = vld [vmem:[%s2 + $0x10] sm:$0xff]
  %v201 = vld [vmem:[%s2 + $0x18] sm:$0xff]
  %v202 = vld [vmem:[%s2 + $0x20] sm:$0xff]
  %v203 = vld [vmem:[%s2 + $0x28] sm:$0xff]
  %v204 = vld [vmem:[%s2 + $0x30] sm:$0xff]
  %v205 = vld [vmem:[%s2 + $0x38] sm:$0xff]
  %v207 = vsel %vm122, %v196, 0
  %209 = vmatprep.subr.mxu0 0.0
  %210 = vmatpush1.msra.mxu0 0.0
  %211 = vmatprep.subr.mxu0 0.0
  %212 = vmatpush1.msra.mxu0 0.0
  %213 = vmatprep.subr.mxu0 0.0
  %214 = vmatpush1.msra.mxu0 0.0
  %215 = vmatprep.subr.mxu0 0.0
  %216 = vmatpush1.msra.mxu0 0.0
  %217 = vmatprep.subr.mxu0 0.0
  %218 = vmatpush1.msra.mxu0 0.0
  %219 = vmatprep.subr.mxu0 0.0
  %220 = vmatpush1.msra.mxu0 0.0
  %221 = vmatprep.subr.mxu0 0.0
  %222 = vmatpush1.msra.mxu0 0.0
  %223 = vmatprep.subr.mxu0 0.0
  %224 = vmatpush1.msra.mxu0 0.0
  %225 = vmatprep.subr.mxu0 0.0
  %226 = vmatpush1.msra.mxu0 %v205
  %227 = vmatprep.subr.mxu0 0.0
  %228 = vmatpush1.msra.mxu0 %v204
  %229 = vmatprep.subr.mxu0 0.0
  %230 = vmatpush1.msra.mxu0 %v203
  %231 = vmatprep.subr.mxu0 0.0
  %232 = vmatpush1.msra.mxu0 %v202
  %233 = vmatprep.subr.mxu0 0.0
  %234 = vmatpush1.msra.mxu0 %v201
  %235 = vmatprep.subr.mxu0 0.0
  %236 = vmatpush1.msra.mxu0 %v200
  %237 = vmatprep.subr.mxu0 0.0
  %238 = vmatpush1.msra.mxu0 %v199
  %239 = vmatprep.subr.mxu0 0.0
  %240 = vmatpush1.msra.mxu0 %v198
  %241 = vmatprep.subr.mxu0 0.0
  %242 = vmatpush2.msra.mxu0 0.0
  %243 = vmatprep.subr.mxu0 0.0
  %244 = vmatpush2.msra.mxu0 0.0
  %245 = vmatprep.subr.mxu0 0.0
  %246 = vmatpush2.msra.mxu0 0.0
  %247 = vmatprep.subr.mxu0 0.0
  %248 = vmatpush2.msra.mxu0 0.0
  %249 = vmatprep.subr.mxu0 0.0
  %250 = vmatpush2.msra.mxu0 0.0
  %251 = vmatprep.subr.mxu0 0.0
  %252 = vmatpush2.msra.mxu0 0.0
  %253 = vmatprep.subr.mxu0 0.0
  %254 = vmatpush2.msra.mxu0 0.0
  %255 = vmatprep.subr.mxu0 0.0
  %256 = vmatpush2.msra.mxu0 0.0
  %257 = vmatprep.subr.mxu0 0.0
  %258 = vmatpush2.msra.mxu0 0.0
  %259 = vmatprep.subr.mxu0 0.0
  %260 = vmatpush2.msra.mxu0 0.0
  %261 = vmatprep.subr.mxu0 0.0
  %262 = vmatpush2.msra.mxu0 0.0
  %263 = vmatprep.subr.mxu0 0.0
  %264 = vmatpush2.msra.mxu0 0.0
  %265 = vmatprep.subr.mxu0 0.0
  %266 = vmatpush2.msra.mxu0 0.0
  %267 = vmatprep.subr.mxu0 0.0
  %268 = vmatpush2.msra.mxu0 0.0
  %269 = vmatprep.subr.mxu0 0.0
  %270 = vmatpush2.msra.mxu0 0.0
  %271 = vmatprep.subr.mxu0 0.0
  %272 = vmatpush2.msra.mxu0 0.0
  %273 = vmatprep.mubr.f32.mxu0 0.0
  %274 = vmatmul.mubr.f32.gmra.mxu0 %v207
  %v275 = vpop.f32.mrf.mxu0
  %v276 = vadd.f32 0.0, %v275
  %v277 = vpop.f32.mrf.mxu0
  %278 = vdwg.mxu0
  %s279 = scalar_lea.vmem %s5, 8
  %v280 = vld [vmem:[%s279] sm:$0xff]
  %s281 = scalar_lea.vmem %s2, 64
  %v282 = vld [vmem:[%s281] sm:$0xff]
  %v283 = vld [vmem:[%s281 + $0x8] sm:$0xff]
  %v284 = vld [vmem:[%s281 + $0x10] sm:$0xff]
  %v285 = vld [vmem:[%s281 + $0x18] sm:$0xff]
  %v286 = vld [vmem:[%s281 + $0x20] sm:$0xff]
  %v287 = vld [vmem:[%s281 + $0x28] sm:$0xff]
  %v288 = vld [vmem:[%s281 + $0x30] sm:$0xff]
  %v289 = vld [vmem:[%s281 + $0x38] sm:$0xff]
  %290 = vmatprep.subr.mxu0 0.0
  %291 = vmatpush1.msra.mxu0 0.0
  %292 = vmatprep.subr.mxu0 0.0
  %293 = vmatpush1.msra.mxu0 0.0
  %294 = vmatprep.subr.mxu0 0.0
  %295 = vmatpush1.msra.mxu0 0.0
  %296 = vmatprep.subr.mxu0 0.0
  %297 = vmatpush1.msra.mxu0 0.0
  %298 = vmatprep.subr.mxu0 0.0
  %299 = vmatpush1.msra.mxu0 0.0
  %300 = vmatprep.subr.mxu0 0.0
  %301 = vmatpush1.msra.mxu0 0.0
  %302 = vmatprep.subr.mxu0 0.0
  %303 = vmatpush1.msra.mxu0 0.0
  %304 = vmatprep.subr.mxu0 0.0
  %305 = vmatpush1.msra.mxu0 0.0
  %306 = vmatprep.subr.mxu0 0.0
  %307 = vmatpush1.msra.mxu0 %v289
  %308 = vmatprep.subr.mxu0 0.0
  %309 = vmatpush1.msra.mxu0 %v288
  %310 = vmatprep.subr.mxu0 0.0
  %311 = vmatpush1.msra.mxu0 %v287
  %312 = vmatprep.subr.mxu0 0.0
  %313 = vmatpush1.msra.mxu0 %v286
  %314 = vmatprep.subr.mxu0 0.0
  %315 = vmatpush1.msra.mxu0 %v285
  %316 = vmatprep.subr.mxu0 0.0
  %317 = vmatpush1.msra.mxu0 %v284
  %318 = vmatprep.subr.mxu0 0.0
  %319 = vmatpush1.msra.mxu0 %v283
  %320 = vmatprep.subr.mxu0 0.0
  %321 = vmatpush1.msra.mxu0 %v282
  %322 = vmatprep.subr.mxu0 0.0
  %323 = vmatpush2.msra.mxu0 0.0
  %324 = vmatprep.subr.mxu0 0.0
  %325 = vmatpush2.msra.mxu0 0.0
  %326 = vmatprep.subr.mxu0 0.0
  %327 = vmatpush2.msra.mxu0 0.0
  %328 = vmatprep.subr.mxu0 0.0
  %329 = vmatpush2.msra.mxu0 0.0
  %330 = vmatprep.subr.mxu0 0.0
  %331 = vmatpush2.msra.mxu0 0.0
  %332 = vmatprep.subr.mxu0 0.0
  %333 = vmatpush2.msra.mxu0 0.0
  %334 = vmatprep.subr.mxu0 0.0
  %335 = vmatpush2.msra.mxu0 0.0
  %336 = vmatprep.subr.mxu0 0.0
  %337 = vmatpush2.msra.mxu0 0.0
  %338 = vmatprep.subr.mxu0 0.0
  %339 = vmatpush2.msra.mxu0 0.0
  %340 = vmatprep.subr.mxu0 0.0
  %341 = vmatpush2.msra.mxu0 0.0
  %342 = vmatprep.subr.mxu0 0.0
  %343 = vmatpush2.msra.mxu0 0.0
  %344 = vmatprep.subr.mxu0 0.0
  %345 = vmatpush2.msra.mxu0 0.0
  %346 = vmatprep.subr.mxu0 0.0
  %347 = vmatpush2.msra.mxu0 0.0
  %348 = vmatprep.subr.mxu0 0.0
  %349 = vmatpush2.msra.mxu0 0.0
  %350 = vmatprep.subr.mxu0 0.0
  %351 = vmatpush2.msra.mxu0 0.0
  %352 = vmatprep.subr.mxu0 0.0
  %353 = vmatpush2.msra.mxu0 0.0
  %354 = vmatprep.mubr.f32.mxu0 0.0
  %355 = vmatmul.mubr.f32.gmra.mxu0 %v207
  %v356 = vpop.f32.mrf.mxu0
  %v357 = vadd.f32 0.0, %v356
  %v358 = vpop.f32.mrf.mxu0
  %359 = vdwg.mxu0
  %v361 = vsel %vm34, %v280, 0
  %363 = vmatprep.subr.mxu0 0.0
  %364 = vmatpush1.msra.mxu0 0.0
  %365 = vmatprep.subr.mxu0 0.0
  %366 = vmatpush1.msra.mxu0 0.0
  %367 = vmatprep.subr.mxu0 0.0
  %368 = vmatpush1.msra.mxu0 0.0
  %369 = vmatprep.subr.mxu0 0.0
  %370 = vmatpush1.msra.mxu0 0.0
  %371 = vmatprep.subr.mxu0 0.0
  %372 = vmatpush1.msra.mxu0 0.0
  %373 = vmatprep.subr.mxu0 0.0
  %374 = vmatpush1.msra.mxu0 0.0
  %375 = vmatprep.subr.mxu0 0.0
  %376 = vmatpush1.msra.mxu0 0.0
  %377 = vmatprep.subr.mxu0 0.0
  %378 = vmatpush1.msra.mxu0 0.0
  %379 = vmatprep.subr.mxu0 0.0
  %380 = vmatpush1.msra.mxu0 0.0
  %381 = vmatprep.subr.mxu0 0.0
  %382 = vmatpush1.msra.mxu0 0.0
  %383 = vmatprep.subr.mxu0 0.0
  %384 = vmatpush1.msra.mxu0 0.0
  %385 = vmatprep.subr.mxu0 0.0
  %386 = vmatpush1.msra.mxu0 0.0
  %387 = vmatprep.subr.mxu0 0.0
  %388 = vmatpush1.msra.mxu0 0.0
  %389 = vmatprep.subr.mxu0 0.0
  %390 = vmatpush1.msra.mxu0 0.0
  %391 = vmatprep.subr.mxu0 0.0
  %392 = vmatpush1.msra.mxu0 0.0
  %393 = vmatprep.subr.mxu0 0.0
  %394 = vmatpush1.msra.mxu0 %v357
  %395 = vmatprep.subr.mxu0 0.0
  %396 = vmatpush2.msra.mxu0 0.0
  %397 = vmatprep.subr.mxu0 0.0
  %398 = vmatpush2.msra.mxu0 0.0
  %399 = vmatprep.subr.mxu0 0.0
  %400 = vmatpush2.msra.mxu0 0.0
  %401 = vmatprep.subr.mxu0 0.0
  %402 = vmatpush2.msra.mxu0 0.0
  %403 = vmatprep.subr.mxu0 0.0
  %404 = vmatpush2.msra.mxu0 0.0
  %405 = vmatprep.subr.mxu0 0.0
  %406 = vmatpush2.msra.mxu0 0.0
  %407 = vmatprep.subr.mxu0 0.0
  %408 = vmatpush2.msra.mxu0 0.0
  %409 = vmatprep.subr.mxu0 0.0
  %410 = vmatpush2.msra.mxu0 0.0
  %411 = vmatprep.subr.mxu0 0.0
  %412 = vmatpush2.msra.mxu0 0.0
  %413 = vmatprep.subr.mxu0 0.0
  %414 = vmatpush2.msra.mxu0 0.0
  %415 = vmatprep.subr.mxu0 0.0
  %416 = vmatpush2.msra.mxu0 0.0
  %417 = vmatprep.subr.mxu0 0.0
  %418 = vmatpush2.msra.mxu0 0.0
  %419 = vmatprep.subr.mxu0 0.0
  %420 = vmatpush2.msra.mxu0 0.0
  %421 = vmatprep.subr.mxu0 0.0
  %422 = vmatpush2.msra.mxu0 0.0
  %423 = vmatprep.subr.mxu0 0.0
  %424 = vmatpush2.msra.mxu0 0.0
  %425 = vmatprep.subr.mxu0 0.0
  %426 = vmatpush2.msra.mxu0 0.0
  %427 = vmatprep.mubr.f32.mxu0 0.0
  %428 = vmatmul.mubr.f32.gmra.mxu0 %v361
  %v429 = vpop.f32.mrf.mxu0
  %v430 = vadd.f32 0.0, %v429
  %v431 = vpop.f32.mrf.mxu0
  %432 = vdwg.mxu0
  %v434 = vsel %vm34, %v197, 0
  %436 = vmatprep.subr.mxu0 0.0
  %437 = vmatpush1.msra.mxu0 0.0
  %438 = vmatprep.subr.mxu0 0.0
  %439 = vmatpush1.msra.mxu0 0.0
  %440 = vmatprep.subr.mxu0 0.0
  %441 = vmatpush1.msra.mxu0 0.0
  %442 = vmatprep.subr.mxu0 0.0
  %443 = vmatpush1.msra.mxu0 0.0
  %444 = vmatprep.subr.mxu0 0.0
  %445 = vmatpush1.msra.mxu0 0.0
  %446 = vmatprep.subr.mxu0 0.0
  %447 = vmatpush1.msra.mxu0 0.0
  %448 = vmatprep.subr.mxu0 0.0
  %449 = vmatpush1.msra.mxu0 0.0
  %450 = vmatprep.subr.mxu0 0.0
  %451 = vmatpush1.msra.mxu0 0.0
  %452 = vmatprep.subr.mxu0 0.0
  %453 = vmatpush1.msra.mxu0 0.0
  %454 = vmatprep.subr.mxu0 0.0
  %455 = vmatpush1.msra.mxu0 0.0
  %456 = vmatprep.subr.mxu0 0.0
  %457 = vmatpush1.msra.mxu0 0.0
  %458 = vmatprep.subr.mxu0 0.0
  %459 = vmatpush1.msra.mxu0 0.0
  %460 = vmatprep.subr.mxu0 0.0
  %461 = vmatpush1.msra.mxu0 0.0
  %462 = vmatprep.subr.mxu0 0.0
  %463 = vmatpush1.msra.mxu0 0.0
  %464 = vmatprep.subr.mxu0 0.0
  %465 = vmatpush1.msra.mxu0 0.0
  %466 = vmatprep.subr.mxu0 0.0
  %467 = vmatpush1.msra.mxu0 %v276
  %468 = vmatprep.subr.mxu0 0.0
  %469 = vmatpush2.msra.mxu0 0.0
  %470 = vmatprep.subr.mxu0 0.0
  %471 = vmatpush2.msra.mxu0 0.0
  %472 = vmatprep.subr.mxu0 0.0
  %473 = vmatpush2.msra.mxu0 0.0
  %474 = vmatprep.subr.mxu0 0.0
  %475 = vmatpush2.msra.mxu0 0.0
  %476 = vmatprep.subr.mxu0 0.0
  %477 = vmatpush2.msra.mxu0 0.0
  %478 = vmatprep.subr.mxu0 0.0
  %479 = vmatpush2.msra.mxu0 0.0
  %480 = vmatprep.subr.mxu0 0.0
  %481 = vmatpush2.msra.mxu0 0.0
  %482 = vmatprep.subr.mxu0 0.0
  %483 = vmatpush2.msra.mxu0 0.0
  %484 = vmatprep.subr.mxu0 0.0
  %485 = vmatpush2.msra.mxu0 0.0
  %486 = vmatprep.subr.mxu0 0.0
  %487 = vmatpush2.msra.mxu0 0.0
  %488 = vmatprep.subr.mxu0 0.0
  %489 = vmatpush2.msra.mxu0 0.0
  %490 = vmatprep.subr.mxu0 0.0
  %491 = vmatpush2.msra.mxu0 0.0
  %492 = vmatprep.subr.mxu0 0.0
  %493 = vmatpush2.msra.mxu0 0.0
  %494 = vmatprep.subr.mxu0 0.0
  %495 = vmatpush2.msra.mxu0 0.0
  %496 = vmatprep.subr.mxu0 0.0
  %497 = vmatpush2.msra.mxu0 0.0
  %498 = vmatprep.subr.mxu0 0.0
  %499 = vmatpush2.msra.mxu0 0.0
  %500 = vmatprep.mubr.f32.mxu0 0.0
  %501 = vmatmul.mubr.f32.gmra.mxu0 %v434
  %v502 = vpop.f32.mrf.mxu0
  %v503 = vadd.f32 %v430, %v502
  %v504 = vpop.f32.mrf.mxu0
  %505 = vdwg.mxu0
  %s506 = scalar_lea.vmem %s5, 16
  %v507 = vld [vmem:[%s506] sm:$0xff]
  %s508 = scalar_lea.vmem %s2, 128
  %v509 = vld [vmem:[%s508] sm:$0xff]
  %v510 = vld [vmem:[%s508 + $0x8] sm:$0xff]
  %v511 = vld [vmem:[%s508 + $0x10] sm:$0xff]
  %v512 = vld [vmem:[%s508 + $0x18] sm:$0xff]
  %v513 = vld [vmem:[%s508 + $0x20] sm:$0xff]
  %v514 = vld [vmem:[%s508 + $0x28] sm:$0xff]
  %v515 = vld [vmem:[%s508 + $0x30] sm:$0xff]
  %v516 = vld [vmem:[%s508 + $0x38] sm:$0xff]
  %517 = vmatprep.subr.mxu0 0.0
  %518 = vmatpush1.msra.mxu0 0.0
  %519 = vmatprep.subr.mxu0 0.0
  %520 = vmatpush1.msra.mxu0 0.0
  %521 = vmatprep.subr.mxu0 0.0
  %522 = vmatpush1.msra.mxu0 0.0
  %523 = vmatprep.subr.mxu0 0.0
  %524 = vmatpush1.msra.mxu0 0.0
  %525 = vmatprep.subr.mxu0 0.0
  %526 = vmatpush1.msra.mxu0 0.0
  %527 = vmatprep.subr.mxu0 0.0
  %528 = vmatpush1.msra.mxu0 0.0
  %529 = vmatprep.subr.mxu0 0.0
  %530 = vmatpush1.msra.mxu0 0.0
  %531 = vmatprep.subr.mxu0 0.0
  %532 = vmatpush1.msra.mxu0 0.0
  %533 = vmatprep.subr.mxu0 0.0
  %534 = vmatpush1.msra.mxu0 %v516
  %535 = vmatprep.subr.mxu0 0.0
  %536 = vmatpush1.msra.mxu0 %v515
  %537 = vmatprep.subr.mxu0 0.0
  %538 = vmatpush1.msra.mxu0 %v514
  %539 = vmatprep.subr.mxu0 0.0
  %540 = vmatpush1.msra.mxu0 %v513
  %541 = vmatprep.subr.mxu0 0.0
  %542 = vmatpush1.msra.mxu0 %v512
  %543 = vmatprep.subr.mxu0 0.0
  %544 = vmatpush1.msra.mxu0 %v511
  %545 = vmatprep.subr.mxu0 0.0
  %546 = vmatpush1.msra.mxu0 %v510
  %547 = vmatprep.subr.mxu0 0.0
  %548 = vmatpush1.msra.mxu0 %v509
  %549 = vmatprep.subr.mxu0 0.0
  %550 = vmatpush2.msra.mxu0 0.0
  %551 = vmatprep.subr.mxu0 0.0
  %552 = vmatpush2.msra.mxu0 0.0
  %553 = vmatprep.subr.mxu0 0.0
  %554 = vmatpush2.msra.mxu0 0.0
  %555 = vmatprep.subr.mxu0 0.0
  %556 = vmatpush2.msra.mxu0 0.0
  %557 = vmatprep.subr.mxu0 0.0
  %558 = vmatpush2.msra.mxu0 0.0
  %559 = vmatprep.subr.mxu0 0.0
  %560 = vmatpush2.msra.mxu0 0.0
  %561 = vmatprep.subr.mxu0 0.0
  %562 = vmatpush2.msra.mxu0 0.0
  %563 = vmatprep.subr.mxu0 0.0
  %564 = vmatpush2.msra.mxu0 0.0
  %565 = vmatprep.subr.mxu0 0.0
  %566 = vmatpush2.msra.mxu0 0.0
  %567 = vmatprep.subr.mxu0 0.0
  %568 = vmatpush2.msra.mxu0 0.0
  %569 = vmatprep.subr.mxu0 0.0
  %570 = vmatpush2.msra.mxu0 0.0
  %571 = vmatprep.subr.mxu0 0.0
  %572 = vmatpush2.msra.mxu0 0.0
  %573 = vmatprep.subr.mxu0 0.0
  %574 = vmatpush2.msra.mxu0 0.0
  %575 = vmatprep.subr.mxu0 0.0
  %576 = vmatpush2.msra.mxu0 0.0
  %577 = vmatprep.subr.mxu0 0.0
  %578 = vmatpush2.msra.mxu0 0.0
  %579 = vmatprep.subr.mxu0 0.0
  %580 = vmatpush2.msra.mxu0 0.0
  %581 = vmatprep.mubr.f32.mxu0 0.0
  %582 = vmatmul.mubr.f32.gmra.mxu0 %v207
  %v583 = vpop.f32.mrf.mxu0
  %v584 = vadd.f32 0.0, %v583
  %v585 = vpop.f32.mrf.mxu0
  %586 = vdwg.mxu0
  %v588 = vsel %vm34, %v507, 0
  %590 = vmatprep.subr.mxu0 0.0
  %591 = vmatpush1.msra.mxu0 0.0
  %592 = vmatprep.subr.mxu0 0.0
  %593 = vmatpush1.msra.mxu0 0.0
  %594 = vmatprep.subr.mxu0 0.0
  %595 = vmatpush1.msra.mxu0 0.0
  %596 = vmatprep.subr.mxu0 0.0
  %597 = vmatpush1.msra.mxu0 0.0
  %598 = vmatprep.subr.mxu0 0.0
  %599 = vmatpush1.msra.mxu0 0.0
  %600 = vmatprep.subr.mxu0 0.0
  %601 = vmatpush1.msra.mxu0 0.0
  %602 = vmatprep.subr.mxu0 0.0
  %603 = vmatpush1.msra.mxu0 0.0
  %604 = vmatprep.subr.mxu0 0.0
  %605 = vmatpush1.msra.mxu0 0.0
  %606 = vmatprep.subr.mxu0 0.0
  %607 = vmatpush1.msra.mxu0 0.0
  %608 = vmatprep.subr.mxu0 0.0
  %609 = vmatpush1.msra.mxu0 0.0
  %610 = vmatprep.subr.mxu0 0.0
  %611 = vmatpush1.msra.mxu0 0.0
  %612 = vmatprep.subr.mxu0 0.0
  %613 = vmatpush1.msra.mxu0 0.0
  %614 = vmatprep.subr.mxu0 0.0
  %615 = vmatpush1.msra.mxu0 0.0
  %616 = vmatprep.subr.mxu0 0.0
  %617 = vmatpush1.msra.mxu0 0.0
  %618 = vmatprep.subr.mxu0 0.0
  %619 = vmatpush1.msra.mxu0 0.0
  %620 = vmatprep.subr.mxu0 0.0
  %621 = vmatpush1.msra.mxu0 %v584
  %622 = vmatprep.subr.mxu0 0.0
  %623 = vmatpush2.msra.mxu0 0.0
  %624 = vmatprep.subr.mxu0 0.0
  %625 = vmatpush2.msra.mxu0 0.0
  %626 = vmatprep.subr.mxu0 0.0
  %627 = vmatpush2.msra.mxu0 0.0
  %628 = vmatprep.subr.mxu0 0.0
  %629 = vmatpush2.msra.mxu0 0.0
  %630 = vmatprep.subr.mxu0 0.0
  %631 = vmatpush2.msra.mxu0 0.0
  %632 = vmatprep.subr.mxu0 0.0
  %633 = vmatpush2.msra.mxu0 0.0
  %634 = vmatprep.subr.mxu0 0.0
  %635 = vmatpush2.msra.mxu0 0.0
  %636 = vmatprep.subr.mxu0 0.0
  %637 = vmatpush2.msra.mxu0 0.0
  %638 = vmatprep.subr.mxu0 0.0
  %639 = vmatpush2.msra.mxu0 0.0
  %640 = vmatprep.subr.mxu0 0.0
  %641 = vmatpush2.msra.mxu0 0.0
  %642 = vmatprep.subr.mxu0 0.0
  %643 = vmatpush2.msra.mxu0 0.0
  %644 = vmatprep.subr.mxu0 0.0
  %645 = vmatpush2.msra.mxu0 0.0
  %646 = vmatprep.subr.mxu0 0.0
  %647 = vmatpush2.msra.mxu0 0.0
  %648 = vmatprep.subr.mxu0 0.0
  %649 = vmatpush2.msra.mxu0 0.0
  %650 = vmatprep.subr.mxu0 0.0
  %651 = vmatpush2.msra.mxu0 0.0
  %652 = vmatprep.subr.mxu0 0.0
  %653 = vmatpush2.msra.mxu0 0.0
  %654 = vmatprep.mubr.f32.mxu0 0.0
  %655 = vmatmul.mubr.f32.gmra.mxu0 %v588
  %v656 = vpop.f32.mrf.mxu0
  %v657 = vadd.f32 0.0, %v656
  %v658 = vpop.f32.mrf.mxu0
  %659 = vdwg.mxu0
  %v660 = vadd.f32 %v503, %v657
  %v661 = vld [vmem:[%s6] sm:$0xff]
  %663 = vset.pattern.permute.xlu0 0
  %664 = vperm.xlu0 %663, %v661
  %v665 = vpop.permute.xlu0 %664
  %v667 = vadd.f32 %v660, %v665
  %v668 = vmax.f32 %v667, 0.0
  %v669 = vld [vmem:[%s7] sm:$0xff]
  %v670 = vld [vmem:[%s7 + $0x8] sm:$0xff]
  %v671 = vld [vmem:[%s7 + $0x10] sm:$0xff]
  %v672 = vld [vmem:[%s7 + $0x18] sm:$0xff]
  %v673 = vld [vmem:[%s7 + $0x20] sm:$0xff]
  %v674 = vld [vmem:[%s7 + $0x28] sm:$0xff]
  %v675 = vld [vmem:[%s7 + $0x30] sm:$0xff]
  %v676 = vld [vmem:[%s7 + $0x38] sm:$0xff]
  %v677 = vld [vmem:[%s8] sm:$0x1]
  %v679 = vlaneseq
  %v680 = vshrl.u32 %v679, 7
  %v681 = vsub.s32 0, %v680
  %v682 = vrot.slane %v677, %v681
  %v685 = vsel %vm122, %v668, 0
  %687 = vmatprep.subr.mxu0 0.0
  %688 = vmatpush1.msra.mxu0 0.0
  %689 = vmatprep.subr.mxu0 0.0
  %690 = vmatpush1.msra.mxu0 0.0
  %691 = vmatprep.subr.mxu0 0.0
  %692 = vmatpush1.msra.mxu0 0.0
  %693 = vmatprep.subr.mxu0 0.0
  %694 = vmatpush1.msra.mxu0 0.0
  %695 = vmatprep.subr.mxu0 0.0
  %696 = vmatpush1.msra.mxu0 0.0
  %697 = vmatprep.subr.mxu0 0.0
  %698 = vmatpush1.msra.mxu0 0.0
  %699 = vmatprep.subr.mxu0 0.0
  %700 = vmatpush1.msra.mxu0 0.0
  %701 = vmatprep.subr.mxu0 0.0
  %702 = vmatpush1.msra.mxu0 0.0
  %703 = vmatprep.subr.mxu0 0.0
  %704 = vmatpush1.msra.mxu0 %v676
  %705 = vmatprep.subr.mxu0 0.0
  %706 = vmatpush1.msra.mxu0 %v675
  %707 = vmatprep.subr.mxu0 0.0
  %708 = vmatpush1.msra.mxu0 %v674
  %709 = vmatprep.subr.mxu0 0.0
  %710 = vmatpush1.msra.mxu0 %v673
  %711 = vmatprep.subr.mxu0 0.0
  %712 = vmatpush1.msra.mxu0 %v672
  %713 = vmatprep.subr.mxu0 0.0
  %714 = vmatpush1.msra.mxu0 %v671
  %715 = vmatprep.subr.mxu0 0.0
  %716 = vmatpush1.msra.mxu0 %v670
  %717 = vmatprep.subr.mxu0 0.0
  %718 = vmatpush1.msra.mxu0 %v669
  %719 = vmatprep.subr.mxu0 0.0
  %720 = vmatpush2.msra.mxu0 0.0
  %721 = vmatprep.subr.mxu0 0.0
  %722 = vmatpush2.msra.mxu0 0.0
  %723 = vmatprep.subr.mxu0 0.0
  %724 = vmatpush2.msra.mxu0 0.0
  %725 = vmatprep.subr.mxu0 0.0
  %726 = vmatpush2.msra.mxu0 0.0
  %727 = vmatprep.subr.mxu0 0.0
  %728 = vmatpush2.msra.mxu0 0.0
  %729 = vmatprep.subr.mxu0 0.0
  %730 = vmatpush2.msra.mxu0 0.0
  %731 = vmatprep.subr.mxu0 0.0
  %732 = vmatpush2.msra.mxu0 0.0
  %733 = vmatprep.subr.mxu0 0.0
  %734 = vmatpush2.msra.mxu0 0.0
  %735 = vmatprep.subr.mxu0 0.0
  %736 = vmatpush2.msra.mxu0 0.0
  %737 = vmatprep.subr.mxu0 0.0
  %738 = vmatpush2.msra.mxu0 0.0
  %739 = vmatprep.subr.mxu0 0.0
  %740 = vmatpush2.msra.mxu0 0.0
  %741 = vmatprep.subr.mxu0 0.0
  %742 = vmatpush2.msra.mxu0 0.0
  %743 = vmatprep.subr.mxu0 0.0
  %744 = vmatpush2.msra.mxu0 0.0
  %745 = vmatprep.subr.mxu0 0.0
  %746 = vmatpush2.msra.mxu0 0.0
  %747 = vmatprep.subr.mxu0 0.0
  %748 = vmatpush2.msra.mxu0 0.0
  %749 = vmatprep.subr.mxu0 0.0
  %750 = vmatpush2.msra.mxu0 0.0
  %751 = vmatprep.mubr.f32.mxu0 0.0
  %752 = vmatmul.mubr.f32.gmra.mxu0 %v685
  %v753 = vpop.f32.mrf.mxu0
  %v754 = vadd.f32 %v682, %v753
  %v755 = vpop.f32.mrf.mxu0
  %756 = vdwg.mxu0
  %757 = vst.msk [vmem:[%s9] sm:$0xff] %vm122, %v754
  // Predicated region
  $region38: #{_forward_impl.2} parent=0 // pred_check
    _
  $region39: #{_forward_impl.2} parent=0 // pred_check_branch
    %759 = sbr.rel (0) target = $region41
  $region40: #{_forward_impl.2} parent=0 // pred_region
    _
  $region41: #{_forward_impl.2} parent=0 // pred_fallthru
    _
  // Predicated region
  $region42: #{_forward_impl.2} parent=0 // pred_check
    _
  $region43: #{_forward_impl.2} parent=0 // pred_check_branch
    %761 = sbr.rel (0) target = $region45
  $region44: #{_forward_impl.2} parent=0 // pred_region
    _
  $region45: #{_forward_impl.2} parent=0 // pred_fallthru
    _

</llo_original>
